<compile_context>
chip_gen: v7x
topology: tpu7x:2x2x1
jax: 0.10.0
libtpu: 0.0.40
codegen_flags: <defaults>
</compile_context>

<pallas_src>
import functools

import numpy as np
import jax
import jax.numpy as jnp
from jax.experimental import pallas as pl
from jax.experimental.pallas import tpu as pltpu


def _round_up(x: int, m: int) -> int:
    return ((x + m - 1) // m) * m


def _gaussian_rbf_kernel(r_ref, out_ref, *, coeff, mu_step, basis_size):
    # Lane-dense layout:
    #   r_ref   : (1, TN)  tile of radii (radii on the lane axis)
    #   out_ref : (B, TN)  tile of the Gaussian basis expansion
    # Gaussian centers mu[b] = b * mu_step come from a tiny (B, 1) iota column
    # (single vreg of work), broadcast across lanes by the subtract itself.
    r = r_ref[...]                                                  # (1, TN)
    b_col = jax.lax.broadcasted_iota(jnp.int32, (basis_size, 1), 0)
    mu = b_col.astype(jnp.float32) * mu_step                        # (B, 1)
    t = r - mu                                                      # (B, TN)
    # coeff = -0.5 / sigma^2 folded on host: only sub/mul/mul/exp per element.
    out_ref[...] = jnp.exp(t * t * coeff).astype(out_ref.dtype)


class RadialKernelBasis:
    """Concrete Gaussian radial kernel basis (Pallas/TPU implementation)."""

    # Conservative double-buffered working-set budget: fits v5e's 16 MiB
    # scoped-VMEM default (v6e/v7x have 32 MiB), so no vmem_limit override.
    _VMEM_BUDGET_BYTES = 12 * 1024 * 1024

    def __init__(self, scalar_basis_size: int, kernel_type_name: str,
                 p_diff_vectors, Q_out: int, Q_in: int,
                 lane_tile_cap: int = 32768,
                 out_dtype=jnp.float32):
        self.scalar_basis_size = int(scalar_basis_size)
        self.kernel_type_name = kernel_type_name
        self.Q_out = int(Q_out)
        self.Q_in = int(Q_in)
        # float32 matches the PyTorch module; bf16 halves HBM writeback on
        # v6e/v7x (loosen any exactness checks to ~1e-2 rel if used).
        self.out_dtype = jnp.dtype(out_dtype)

        # Host-side (numpy) statistics: no device round trips at construction.
        p = np.asarray(p_diff_vectors, dtype=np.float32)            # (num_P, 3)
        self.num_P = int(p.shape[0])
        radii = np.sqrt(np.sum(p * p, axis=-1))                     # (num_P,)

        B = self.scalar_basis_size
        r_max_eff = max(float(np.max(radii)), 1e-6)

        # Equally spaced Gaussian centers over [0, r_max]; width = spacing.
        # Consistent degenerate-case handling: both mu_step and sigma derive
        # from the same r_max_eff.
        if B > 1:
            self.mu_step = r_max_eff / (B - 1)
        else:
            self.mu_step = 0.0
        self.sigma = max(self.mu_step if B > 1 else r_max_eff, 1e-6)
        self.mu = jnp.asarray(self.mu_step * np.arange(B, dtype=np.float32))

        # Only the unique radii go through the kernel; the (Q_out, Q_in)
        # broadcast happens afterwards (ideally fused into the consumer).
        self.radii = jnp.asarray(radii)                              # (num_P,)

        # ---- Lane tiling -------------------------------------------------
        p128 = _round_up(self.num_P, 128)

        # VMEM-budget cap: 2 buffers * (output tile + input tile) per lane.
        bytes_per_lane = B * self.out_dtype.itemsize + 4             # out + r
        vmem_cap = max(128, ((self._VMEM_BUDGET_BYTES // (2 * bytes_per_lane))
                             // 128) * 128)
        cap = max(128, min(int(lane_tile_cap), vmem_cap))

        if p128 >= 2 * 128:
            # >= 2 tiles of work: split so the grid has at least 2 parallel
            # steps (feeds both TensorCores on v7x); cap amortizes step cost.
            half = _round_up(p128 // 2, 128)
            self.lane_tile = min(cap, half)
        else:
            self.lane_tile = min(cap, p128)
        self.num_P_pad = _round_up(self.num_P, self.lane_tile)

    # ----------------------------------------------------------------------
    def forward_unique(self) -> jnp.ndarray:
        """Compact (num_P, scalar_basis_size) slab of unique basis values.

        Prefer this over forward() when the consumer can broadcast/contract
        over (Q_out, Q_in) lazily (e.g. via dot_general dimension_numbers):
        it avoids materializing Q_out*Q_in copies of the kernel output.
        """
        B = self.scalar_basis_size
        P, P_pad, TN = self.num_P, self.num_P_pad, self.lane_tile

        # (1, P_pad): radii on the lane axis; zero padding yields finite
        # garbage lanes that are sliced off below.
        r_row = jnp.pad(self.radii, (0, P_pad - P)).reshape(1, P_pad)

        kernel = functools.partial(
            _gaussian_rbf_kernel,
            coeff=float(-0.5 / (self.sigma * self.sigma)),
            mu_step=float(self.mu_step),
            basis_size=B,
        )

        out = pl.pallas_call(
            kernel,
            out_shape=jax.ShapeDtypeStruct((B, P_pad), self.out_dtype),
            grid=(P_pad // TN,),
            in_specs=[pl.BlockSpec((1, TN), lambda i: (0, i))],
            out_specs=pl.BlockSpec((B, TN), lambda i: (0, i)),
            compiler_params=pltpu.CompilerParams(
                dimension_semantics=("parallel",)),
        )(r_row)

        return out[:, :P].T                                          # (P, B)

    def forward(self) -> jnp.ndarray:
        """Spec-shaped output: (Q_out, Q_in, num_P, scalar_basis_size)."""
        basis_pb = self.forward_unique()                              # (P, B)
        # Broadcast stays lazy under jit; consumers that cannot fuse it should
        # use forward_unique() directly.
        return jnp.broadcast_to(
            basis_pb[None, None, :, :],
            (self.Q_out, self.Q_in, self.num_P, self.scalar_basis_size))

    def __repr__(self):
        return (f'<ScalarKernel {self.kernel_type_name} of size '
                f'{self.scalar_basis_size}>')


def _reference(radii, mu, sigma, Q_out, Q_in):
    d = (radii[:, None] - mu[None, :]) / sigma                        # (P, B)
    g = jnp.exp(-0.5 * d * d)
    return jnp.broadcast_to(g[None, None, :, :], (Q_out, Q_in) + g.shape)


if __name__ == "__main__":
    key = jax.random.PRNGKey(0)

    # --- Case 1: tiny deterministic setup (single grid step) -------------
    Q_out, Q_in, num_P, basis_size = 2, 3, 27, 4
    grid = jnp.stack(jnp.meshgrid(*([jnp.arange(-1.0, 2.0)] * 3),
                                  indexing="ij"), axis=-1).reshape(num_P, 3)
    k1, k2 = jax.random.split(key)
    jitter = 0.1 * jax.random.normal(k1, (num_P, 3), dtype=jnp.float32)
    p_diff_vectors = grid.astype(jnp.float32) + jitter                # (27, 3)

    basis = RadialKernelBasis(
        scalar_basis_size=basis_size,
        kernel_type_name="gaussian",
        p_diff_vectors=p_diff_vectors,
        Q_out=Q_out,
        Q_in=Q_in,
    )
    out = jax.block_until_ready(basis.forward())
    assert out.shape == (Q_out, Q_in, num_P, basis_size), out.shape
    ref = _reference(basis.radii, basis.mu, basis.sigma, Q_out, Q_in)
    assert jnp.allclose(out, ref, atol=1e-5, rtol=1e-5), "case1 mismatch"

    # --- Case 2: larger num_P to exercise the multi-step (>=2 tile) grid --
    num_P2 = 300
    p2 = jax.random.normal(k2, (num_P2, 3), dtype=jnp.float32)
    basis2 = RadialKernelBasis(
        scalar_basis_size=8,            # sublane-aligned B
        kernel_type_name="gaussian",
        p_diff_vectors=p2,
        Q_out=1,
        Q_in=2,
    )
    assert basis2.num_P_pad // basis2.lane_tile >= 2   # grid >= 2 steps
    out2 = jax.block_until_ready(basis2.forward())
    assert out2.shape == (1, 2, num_P2, 8), out2.shape
    ref2 = _reference(basis2.radii, basis2.mu, basis2.sigma, 1, 2)
    assert jnp.allclose(out2, ref2, atol=1e-5, rtol=1e-5), "case2 mismatch"

    print("KERNEL_OK")
</pallas_src>

<mosaic_0001>
module attributes {stable_mosaic.version = 11 : i64} {
  func.func @_gaussian_rbf_kernel(%arg0: i32, %arg1: memref<1x128xf32, #tpu.memory_space<vmem>>, %arg2: memref<4x128xf32, #tpu.memory_space<vmem>>) attributes {dimension_semantics = [#tpu.dimension_semantics<parallel>], iteration_bounds = array<i64: 1>, scalar_prefetch = 0 : i64, scratch_operands = 0 : i64, tpu.core_type = #tpu.core_type<tc>, window_params = [{transform_indices = @transform_0, window_bounds = array<i64: 1, 128>}, {transform_indices = @transform_1, window_bounds = array<i64: 4, 128>}]} {
    %c0 = arith.constant 0 : index
    %c0_0 = arith.constant 0 : index
    %0 = vector.load %arg1[%c0, %c0_0] : memref<1x128xf32, #tpu.memory_space<vmem>>, vector<1x128xf32>
    %1 = tpu.iota {dimensions = array<i32: 0>} : vector<4x1xi32>
    %2 = arith.sitofp %1 : vector<4x1xi32> to vector<4x1xf32>
    %cst = arith.constant 0.617884278 : f32
    %3 = vector.broadcast %cst : f32 to vector<4x1xf32>
    %4 = arith.mulf %2, %3 : vector<4x1xf32>
    %5 = vector.broadcast %0 : vector<1x128xf32> to vector<4x128xf32>
    %6 = vector.broadcast %4 : vector<4x1xf32> to vector<4x128xf32>
    %7 = arith.subf %5, %6 : vector<4x128xf32>
    %8 = arith.mulf %7, %7 : vector<4x128xf32>
    %cst_1 = arith.constant -1.30965137 : f32
    %9 = vector.broadcast %cst_1 : f32 to vector<4x128xf32>
    %10 = arith.mulf %8, %9 : vector<4x128xf32>
    %11 = math.exp %10 : vector<4x128xf32>
    %c0_2 = arith.constant 0 : index
    %c0_3 = arith.constant 0 : index
    %12 = vector.load %arg2[%c0_2, %c0_3] : memref<4x128xf32, #tpu.memory_space<vmem>>, vector<4x128xf32>
    tpu.vector_store %arg2[%c0_2, %c0_3], %11 {strides = array<i32>} : memref<4x128xf32, #tpu.memory_space<vmem>>, vector<4x128xf32>,
    return
  }
  func.func @transform_0(%arg0: i32) -> (i32, i32) {
    %c0_i32 = arith.constant 0 : i32
    %c0_i32_0 = arith.constant 0 : i32
    return %c0_i32, %arg0 : i32, i32
  }
  func.func @transform_1(%arg0: i32) -> (i32, i32) {
    %c0_i32 = arith.constant 0 : i32
    %c0_i32_0 = arith.constant 0 : i32
    return %c0_i32, %arg0 : i32, i32
  }
}

</mosaic_0001>

<llo_original>
// kernel: tpu_custom_call.1
$region0: #{tpu_custom_call.1}
  #allocation0 [shape = 'u32[]', space=smem, size = 0x4, offset = 0x4, fixed_abs, tag = 'smem constant byte address 0x4 - core index']
  #allocation1 [shape = 'u32[144,128]{1,0:T(1,128)}', space=vmem, size = 0x12000, scoped, tag = 'internal scratch']
  %s0 = inlined_call_operand.hbm [shape: f32[1,128], index: 0, kind: input, shape index: {}]
  %s1 = inlined_call_operand.hbm [shape: f32[4,128], index: 1, kind: output, shape index: {}]
  %s2 = sld [smem:[#allocation0]]
  $region18: #{tpu_custom_call.1} parent=0
    _
  %s4 = ssub.s32 1, %s2
  %s5 = scalar_select 0, %s4, %s2
  $region1: #{tpu_custom_call.1} parent=0
    #allocation2 [shape = 'u8[512]{0}', space=vmem, size = 0x400, scoped, tag = 'input window, operand 0, single buffered']
    #allocation3 [shape = 's32[1]{0}', space=sflag, size = 0x4, scoped, tag = 'scoped memory for tpu_custom_call.1']
    #allocation4 [shape = 's32[1]{0}', space=sflag, size = 0x4, scoped, tag = 'scoped memory for tpu_custom_call.1']
    #allocation5 [shape = 'u8[2048]{0}', space=vmem, size = 0x800, scoped, tag = 'output window, operand 0, single buffered']
    %6 = vsyncpa [#allocation3], 0
    %7 = vsyncpa [#allocation4], 0
    // Predicated region
    $region2: #{tpu_custom_call.1} parent=1 // pred_check
      _
    $region3: #{tpu_custom_call.1} parent=1 // pred_check_branch
      %9 = sbr.rel (0) target = $region5
    $region4: #{tpu_custom_call.1} parent=1 // pred_region
      %s11 = ssub.s32 16, 16
      %12 = vsyncadd [#allocation3], %s11
      %s14 = sshll.u32 [#allocation2], 4
      %s15 = int_to_ptr.vmem [resolvable:$true] %s14
      %17 = dma.hbm_to_vmem [thread:$0]  %s0, 16, %s15, [#allocation3]
    $region5: #{tpu_custom_call.1} parent=1 // pred_fallthru
      _
    // Predicated region
    $region6: #{tpu_custom_call.1} parent=1 // pred_check
      _
    $region7: #{tpu_custom_call.1} parent=1 // pred_check_branch
      %19 = sbr.rel (0) target = $region9
    $region8: #{tpu_custom_call.1} parent=1 // pred_region
      %20 = dma.done [#allocation3], 16
    $region9: #{tpu_custom_call.1} parent=1 // pred_fallthru
      _
    %v21 = vld [vmem:[#allocation2] sm:$0x1]
    %v22 = vlaneseq
    %v23 = vshrl.u32 %v22, 7
    %v24 = vcvt.s32.f32 %v23
    %v25 = vmul.f32 %v24, 0.6178843
    %v27 = vlaneseq
    %v28 = vshrl.u32 %v27, 7
    %v29 = vsub.s32 0, %v28
    %v30 = vrot.slane %v21, %v29
    %v32 = vsub.f32 %v30, %v25
    %v33 = vmul.f32 %v32, %v32
    %v34 = vmul.f32 %v33, -1.3096514
    %v35 = vmul.f32 %v34, 1.442695
    %v36 = vpow.pop %v35
    %37 = vst [vmem:[#allocation5] sm:$0xf] %v36
    // Predicated region
    $region10: #{tpu_custom_call.1} parent=1 // pred_check
      _
    $region11: #{tpu_custom_call.1} parent=1 // pred_check_branch
      %39 = sbr.rel (0) target = $region13
    $region12: #{tpu_custom_call.1} parent=1 // pred_region
      %s41 = ssub.s32 64, 64
      %42 = vsyncadd [#allocation4], %s41
      %s44 = sshll.u32 [#allocation5], 4
      %s45 = int_to_ptr.vmem [resolvable:$true] %s44
      %47 = dma.vmem_to_hbm [thread:$0]  %s45, 64, %s1, [#allocation4]
    $region13: #{tpu_custom_call.1} parent=1 // pred_fallthru
      _
    // Predicated region
    $region14: #{tpu_custom_call.1} parent=1 // pred_check
      _
    $region15: #{tpu_custom_call.1} parent=1 // pred_check_branch
      %49 = sbr.rel (0) target = $region17
    $region16: #{tpu_custom_call.1} parent=1 // pred_region
      %50 = dma.done [#allocation4], 64
    $region17: #{tpu_custom_call.1} parent=1 // pred_fallthru
      _
    %51 = vsyncpa [#allocation3], 1
    %52 = vsyncpa [#allocation4], 1

</llo_original>
